<compile_context>
chip_gen: v7x
topology: tpu7x:2x2x1
jax: 0.10.0
libtpu: 0.0.40
codegen_flags: <defaults>
</compile_context>

<pallas_src>
import functools

import jax
import jax.numpy as jnp
from jax.experimental import pallas as pl
from jax.experimental.pallas import tpu as pltpu


def _round_up(x: int, m: int) -> int:
    return ((x + m - 1) // m) * m


def _cross_entropy_kernel(logits_ref, targets_ref, nll_ref, *, n_valid, tile_n):
    # logits_ref: (tile_n, C) native dtype, targets_ref: (tile_n, 1) int32,
    # nll_ref: (tile_n, 1) float32 per-row negative log-likelihood.
    x = logits_ref[...].astype(jnp.float32)               # upcast in VMEM
    t = targets_ref[...]                                   # (tile_n, 1) int32

    # numerically-stable logsumexp over the class (lane) axis
    m = jnp.max(x, axis=-1, keepdims=True)                 # (tile_n, 1)
    lse = jnp.log(jnp.sum(jnp.exp(x - m), axis=-1, keepdims=True)) + m

    # gather target logit via int32 compare + where-select + lane reduce
    col = jax.lax.broadcasted_iota(jnp.int32, x.shape, dimension=1)
    picked = jnp.sum(jnp.where(col == t, x, 0.0), axis=-1, keepdims=True)

    per_row = lse - picked                                  # (tile_n, 1)

    # mask rows that belong to the partial last batch tile (garbage input,
    # possibly NaN) so downstream sums stay clean; scalar-derived bound.
    rows_valid = n_valid - pl.program_id(0) * tile_n
    row = jax.lax.broadcasted_iota(jnp.int32, per_row.shape, dimension=0)
    nll_ref[...] = jnp.where(row < rows_valid, per_row, 0.0)


def cross_entropy(logits, targets, *, max_tile_n=512):
    """logits: (N, C) float array; targets: (N,) int class indices.

    Returns scalar float32 mean cross-entropy (matches nn.CrossEntropyLoss()).
    """
    N, C = logits.shape
    itemsize = jnp.dtype(logits.dtype).itemsize
    sub = max(8, 32 // itemsize)          # sublane packing: 8 f32, 16 bf16, 32 int8

    # Per-generation VMEM budget / scoped limit.
    try:
        vmem_cap = int(getattr(pltpu.get_tpu_info(), "vmem_capacity_bytes",
                               64 * 1024 * 1024))
    except Exception:
        vmem_cap = 64 * 1024 * 1024
    if vmem_cap >= 128 * 1024 * 1024:     # v5e / v6e
        vmem_budget = 96 * 1024 * 1024
        vmem_limit = 110 * 1024 * 1024
    else:                                 # v7x (64 MiB per TC) or unknown
        vmem_budget = 40 * 1024 * 1024
        vmem_limit = 48 * 1024 * 1024

    # tile_n sizing: double-buffered native-dtype tile + ~one f32 temp slab.
    c_lanes = _round_up(C, 128)
    per_row_bytes = c_lanes * (2 * itemsize + 4)
    budget_rows = max(sub, (vmem_budget // per_row_bytes) // sub * sub)

    # keep >= 2 tiles so the "parallel" batch axis shards across both v7x TCs
    two_tc_cap = _round_up(pl.cdiv(N, 2), sub)
    tile_n = max(sub, min(max_tile_n, budget_rows, two_tc_cap, _round_up(N, sub)))
    num_tiles = pl.cdiv(N, tile_n)

    targets_2d = targets.astype(jnp.int32).reshape(N, 1)

    cost = pl.CostEstimate(
        flops=5 * N * C,
        transcendentals=N * C,
        bytes_accessed=N * C * itemsize + 2 * N * 4,
    )

    nll = pl.pallas_call(
        functools.partial(_cross_entropy_kernel, n_valid=N, tile_n=tile_n),
        out_shape=jax.ShapeDtypeStruct((N, 1), jnp.float32),
        grid=(num_tiles,),
        in_specs=[
            pl.BlockSpec((tile_n, C), lambda i: (i, 0)),
            pl.BlockSpec((tile_n, 1), lambda i: (i, 0)),
        ],
        out_specs=pl.BlockSpec((tile_n, 1), lambda i: (i, 0)),
        compiler_params=pltpu.CompilerParams(
            dimension_semantics=("parallel",),
            vmem_limit_bytes=vmem_limit,
        ),
        cost_estimate=cost,
    )(logits, targets_2d)

    # Padded / partial rows were zeroed (or never written); true-N mean.
    return jnp.sum(nll) / jnp.float32(N)


def _reference(logits, targets):
    return jnp.mean(
        jax.nn.logsumexp(logits.astype(jnp.float32), axis=-1)
        - jnp.take_along_axis(logits.astype(jnp.float32),
                              targets[:, None], axis=-1)[:, 0]
    )


if __name__ == "__main__":
    key = jax.random.PRNGKey(0)
    k1, k2, k3, k4 = jax.random.split(key, 4)

    # Case 1: small, aligned-ish toy shape (batch=8, classes=32).
    logits_a = jax.random.normal(k1, (8, 32), dtype=jnp.float32)
    targets_a = jax.random.randint(k2, (8,), 0, 32, dtype=jnp.int32)
    loss_a = cross_entropy(logits_a, targets_a)
    jax.block_until_ready(loss_a)
    ref_a = _reference(logits_a, targets_a)
    assert jnp.allclose(loss_a, ref_a, atol=1e-5, rtol=1e-5), (loss_a, ref_a)

    # Case 2: ragged shape exercising non-128 C and a partial batch tile
    # (batch=13, classes=200) -- no wrapper-side padding anywhere.
    logits_b = jax.random.normal(k3, (13, 200), dtype=jnp.float32)
    targets_b = jax.random.randint(k4, (13,), 0, 200, dtype=jnp.int32)
    loss_b = cross_entropy(logits_b, targets_b)
    jax.block_until_ready(loss_b)
    ref_b = _reference(logits_b, targets_b)
    assert jnp.allclose(loss_b, ref_b, atol=1e-5, rtol=1e-5), (loss_b, ref_b)

    print("KERNEL_OK")
</pallas_src>

<mosaic_0001>
module attributes {stable_mosaic.version = 11 : i64} {
  func.func @_cross_entropy_kernel(%arg0: i32, %arg1: memref<8x32xf32, #tpu.memory_space<vmem>>, %arg2: memref<8x1xi32, #tpu.memory_space<vmem>>, %arg3: memref<8x1xf32, #tpu.memory_space<vmem>>) attributes {dimension_semantics = [#tpu.dimension_semantics<parallel>], iteration_bounds = array<i64: 1>, scalar_prefetch = 0 : i64, scratch_operands = 0 : i64, tpu.core_type = #tpu.core_type<tc>, window_params = [{transform_indices = @transform_0, window_bounds = array<i64: 8, 32>}, {transform_indices = @transform_1, window_bounds = array<i64: 8, 1>}, {transform_indices = @transform_2, window_bounds = array<i64: 8, 1>}]} {
    %c0 = arith.constant 0 : index
    %c0_0 = arith.constant 0 : index
    %0 = vector.load %arg1[%c0, %c0_0] : memref<8x32xf32, #tpu.memory_space<vmem>>, vector<8x32xf32>
    %c0_1 = arith.constant 0 : index
    %c0_2 = arith.constant 0 : index
    %1 = vector.load %arg2[%c0_1, %c0_2] : memref<8x1xi32, #tpu.memory_space<vmem>>, vector<8x1xi32>
    %cst = arith.constant dense<0xFF800000> : vector<8xf32>
    %2 = vector.multi_reduction <maximumf>, %0, %cst [1] : vector<8x32xf32> to vector<8xf32>
    %3 = vector.shape_cast %2 : vector<8xf32> to vector<8x1xf32>
    %4 = vector.broadcast %3 : vector<8x1xf32> to vector<8x32xf32>
    %5 = arith.subf %0, %4 : vector<8x32xf32>
    %6 = math.exp %5 : vector<8x32xf32>
    %cst_3 = arith.constant dense<0.000000e+00> : vector<8xf32>
    %7 = vector.multi_reduction <add>, %6, %cst_3 [1] : vector<8x32xf32> to vector<8xf32>
    %8 = vector.shape_cast %7 : vector<8xf32> to vector<8x1xf32>
    %9 = math.log %8 : vector<8x1xf32>
    %10 = arith.addf %9, %3 : vector<8x1xf32>
    %11 = tpu.iota {dimensions = array<i32: 1>} : vector<8x32xi32>
    %12 = vector.broadcast %1 : vector<8x1xi32> to vector<8x32xi32>
    %13 = arith.cmpi eq, %11, %12 : vector<8x32xi32>
    %cst_4 = arith.constant 0.000000e+00 : f32
    %14 = vector.broadcast %cst_4 : f32 to vector<8x32xf32>
    %15 = arith.select %13, %0, %14 : vector<8x32xi1>, vector<8x32xf32>
    %cst_5 = arith.constant dense<0.000000e+00> : vector<8xf32>
    %16 = vector.multi_reduction <add>, %15, %cst_5 [1] : vector<8x32xf32> to vector<8xf32>
    %17 = vector.shape_cast %16 : vector<8xf32> to vector<8x1xf32>
    %18 = arith.subf %10, %17 : vector<8x1xf32>
    %c8_i32 = arith.constant 8 : i32
    %19 = arith.muli %arg0, %c8_i32 : i32
    %c8_i32_6 = arith.constant 8 : i32
    %20 = arith.subi %c8_i32_6, %19 : i32
    %21 = tpu.iota {dimensions = array<i32: 0>} : vector<8x1xi32>
    %22 = vector.broadcast %20 : i32 to vector<8x1xi32>
    %23 = arith.cmpi slt, %21, %22 : vector<8x1xi32>
    %cst_7 = arith.constant 0.000000e+00 : f32
    %24 = vector.broadcast %cst_7 : f32 to vector<8x1xf32>
    %25 = arith.select %23, %18, %24 : vector<8x1xi1>, vector<8x1xf32>
    %c0_8 = arith.constant 0 : index
    %c0_9 = arith.constant 0 : index
    %26 = vector.load %arg3[%c0_8, %c0_9] : memref<8x1xf32, #tpu.memory_space<vmem>>, vector<8x1xf32>
    tpu.vector_store %arg3[%c0_8, %c0_9], %25 {strides = array<i32>} : memref<8x1xf32, #tpu.memory_space<vmem>>, vector<8x1xf32>,
    return
  }
  func.func @transform_0(%arg0: i32) -> (i32, i32) {
    %c0_i32 = arith.constant 0 : i32
    %c0_i32_0 = arith.constant 0 : i32
    return %arg0, %c0_i32 : i32, i32
  }
  func.func @transform_1(%arg0: i32) -> (i32, i32) {
    %c0_i32 = arith.constant 0 : i32
    %c0_i32_0 = arith.constant 0 : i32
    return %arg0, %c0_i32 : i32, i32
  }
  func.func @transform_2(%arg0: i32) -> (i32, i32) {
    %c0_i32 = arith.constant 0 : i32
    %c0_i32_0 = arith.constant 0 : i32
    return %arg0, %c0_i32 : i32, i32
  }
}

</mosaic_0001>

<llo_original>
// kernel: tpu_custom_call.1
$region0: #{tpu_custom_call.1}
  #allocation0 [shape = 'u32[]', space=smem, size = 0x4, offset = 0x4, fixed_abs, tag = 'smem constant byte address 0x4 - core index']
  #allocation1 [shape = 'u32[144,128]{1,0:T(1,128)}', space=vmem, size = 0x12000, scoped, tag = 'internal scratch']
  %s0 = inlined_call_operand.vmem [shape: f32[8,32], index: 0, kind: input, shape index: {}]
  %s1 = inlined_call_operand.vmem [shape: s32[8,1], index: 1, kind: input, shape index: {}]
  %s2 = inlined_call_operand.vmem [shape: f32[8,1], index: 2, kind: output, shape index: {}]
  %s3 = sld [smem:[#allocation0]]
  $region18: #{tpu_custom_call.1} parent=0
    _
  %s5 = ssub.s32 1, %s3
  %s6 = scalar_select 0, %s5, %s3
  // Predicated region
  $region2: #{tpu_custom_call.1} parent=0 // pred_check
    _
  $region3: #{tpu_custom_call.1} parent=0 // pred_check_branch
    %8 = sbr.rel (0) target = $region5
  $region4: #{tpu_custom_call.1} parent=0 // pred_region
    _
  $region5: #{tpu_custom_call.1} parent=0 // pred_fallthru
    _
  // Predicated region
  $region6: #{tpu_custom_call.1} parent=0 // pred_check
    _
  $region7: #{tpu_custom_call.1} parent=0 // pred_check_branch
    %10 = sbr.rel (0) target = $region9
  $region8: #{tpu_custom_call.1} parent=0 // pred_region
    _
  $region9: #{tpu_custom_call.1} parent=0 // pred_fallthru
    _
  %v11 = vld [vmem:[%s0] sm:$0xff]
  %v12 = vld [vmem:[%s1] sm:$0xff]
  %vm13 = vcmask 261120
  %v14 = vsel %vm13, %v11, -inf
  %15 = vmax.xlane.f32.xlu0 %v14
  %v16 = vpop.xlane.xlu0 %15
  %v17 = vsub.f32 %v11, %v16
  %v18 = vmul.f32 %v17, 1.442695
  %v19 = vpow.pop %v18
  %v20 = vsel %vm13, %v19, 0.0
  %21 = vadd.xlane.f32.xlu0 %v20
  %v22 = vpop.xlane.xlu0 %21
  %v23 = vlog2.pop %v22
  %v24 = vmul.f32 %v23, 0.6931472
  %v25 = vadd.f32 %v24, %v16
  %v26 = vlaneseq
  %v27 = vand.u32 %v26, 127
  %28 = vset.pattern.permute.xlu0 0
  %29 = vperm.xlu0 %28, %v12
  %v30 = vpop.permute.xlu0 %29
  %vm31 = vcmp.eq.s32.totalorder %v27, %v30
  %v32 = vsel %vm31, %v11, 0.0
  %v33 = vsel %vm13, %v32, 0.0
  %34 = vadd.xlane.f32.xlu0 %v33
  %v35 = vpop.xlane.xlu0 %34
  %v36 = vsub.f32 %v25, %v35
  %s37 = smul.u32 0, 8
  %s38 = ssub.s32 8, %s37
  %v39 = vlaneseq
  %v40 = vshrl.u32 %v39, 7
  %v41 = vstv %s38
  %vm42 = vcmp.lt.s32.totalorder %v40, %v41
  %v43 = vsel %vm42, %v36, 0.0
  %vm44 = vcmask 7168
  %45 = vst.msk [vmem:[%s2] sm:$0xff] %vm44, %v43
  // Predicated region
  $region10: #{tpu_custom_call.1} parent=0 // pred_check
    _
  $region11: #{tpu_custom_call.1} parent=0 // pred_check_branch
    %47 = sbr.rel (0) target = $region13
  $region12: #{tpu_custom_call.1} parent=0 // pred_region
    _
  $region13: #{tpu_custom_call.1} parent=0 // pred_fallthru
    _
  // Predicated region
  $region14: #{tpu_custom_call.1} parent=0 // pred_check
    _
  $region15: #{tpu_custom_call.1} parent=0 // pred_check_branch
    %49 = sbr.rel (0) target = $region17
  $region16: #{tpu_custom_call.1} parent=0 // pred_region
    _
  $region17: #{tpu_custom_call.1} parent=0 // pred_fallthru
    _

</llo_original>
